<compile_context>
chip_gen: v7x
topology: tpu7x:2x2x1
jax: 0.10.0
libtpu: 0.0.40
codegen_flags: <defaults>
</compile_context>

<pallas_src>
import numpy as np
import jax
import jax.numpy as jnp
from jax.experimental import pallas as pl
from jax.experimental.pallas import tpu as pltpu

IGNORE_INDEX = -100
_LANE = 128
_SUB = 16                 # sublane multiple: valid tiling for f32 (8,128) and bf16 (16,128)
_MAX_S = 512              # cap on sublane-groups per tile
_TILE_BYTES = 1 << 20     # ~1 MiB logits per tile: fits double-buffered + temporaries on v5e


def _round_up(x, m):
    return ((x + m - 1) // m) * m


def _choose_tile_sublanes(C, HW, itemsize):
    """Pick S = pixel sublane-groups per tile so a logits tile is ~1 MiB."""
    s = _TILE_BYTES // max(1, C * _LANE * itemsize)
    s = max(_SUB, (s // _SUB) * _SUB)
    s = min(s, _MAX_S)
    g_needed = _round_up(pl.cdiv(HW, _LANE), _SUB)   # groups needed to cover HW
    return min(s, g_needed)


# ----------------------------------------------------------------------------
# Pallas kernel: per-scale cross-entropy partial sums (sum of NLL, valid count)
# ----------------------------------------------------------------------------
def _ce_sums_one_scale(logits, target_hw, ignore_index=IGNORE_INDEX):
    """logits: (N, C, H, W) float; target_hw: (N, H*W) int32 ->
       (sum of per-pixel NLL over valid pixels, number of valid pixels)."""
    N, C, H, W = logits.shape
    HW = H * W
    S = _choose_tile_sublanes(C, HW, jnp.dtype(logits.dtype).itemsize)
    tile_pix = S * _LANE
    HW_pad = _round_up(HW, tile_pix)
    G = HW_pad // _LANE                  # lane-groups (sublane axis length)
    num_tiles = HW_pad // tile_pix

    lg = logits.reshape(N, C, HW)
    tg = target_hw.astype(jnp.int32)
    if HW_pad != HW:                     # pad only when needed (no-op at typical shapes)
        lg = jnp.pad(lg, ((0, 0), (0, 0), (0, HW_pad - HW)))
        tg = jnp.pad(tg, ((0, 0), (0, HW_pad - HW)), constant_values=ignore_index)
    # Free reshapes: pixels laid out densely over (sublane, lane).
    lg = lg.reshape(N, C, G, _LANE)
    tg = tg.reshape(N, G, _LANE)

    def kernel(logits_ref, tgt_ref, nll_ref, cnt_ref):
        x = logits_ref[0].astype(jnp.float32)          # (C, S, 128)
        t = tgt_ref[0]                                 # (S, 128) int32

        # numerically-stable log-sum-exp over the class (leading) axis -> VPU only
        m = jnp.max(x, axis=0)                         # (S, 128)
        xs = x - m[None, :, :]                         # shifted logits, computed once
        sumexp = jnp.sum(jnp.exp(xs), axis=0)          # (S, 128)

        # target-class shifted logit via one-hot compare (no gather)
        cls = jax.lax.broadcasted_iota(jnp.int32, x.shape, 0)
        tgt_shifted = jnp.sum(jnp.where(cls == t[None, :, :], xs, 0.0), axis=0)

        valid = t != ignore_index                      # padded pixels are ignore_index
        nll = jnp.where(valid, jnp.log(sumexp) - tgt_shifted, 0.0)

        nll_ref[...] = jnp.sum(nll).reshape(1, 1, 1, 1)
        cnt_ref[...] = jnp.sum(valid.astype(jnp.float32)).reshape(1, 1, 1, 1)

    nll_p, cnt_p = pl.pallas_call(
        kernel,
        out_shape=(jax.ShapeDtypeStruct((N, num_tiles, 1, 1), jnp.float32),
                   jax.ShapeDtypeStruct((N, num_tiles, 1, 1), jnp.float32)),
        grid=(N, num_tiles),
        in_specs=[
            # NOTE: pipeline depth can be raised via pipeline_mode=pl.Buffered(3) if
            # the DMA is exposed; default double-buffering is used here.
            pl.BlockSpec((1, C, S, _LANE), lambda n, h: (n, 0, h, 0)),
            pl.BlockSpec((1, S, _LANE), lambda n, h: (n, h, 0)),
        ],
        out_specs=(
            pl.BlockSpec((1, 1, 1, 1), lambda n, h: (n, h, 0, 0)),
            pl.BlockSpec((1, 1, 1, 1), lambda n, h: (n, h, 0, 0)),
        ),
        compiler_params=pltpu.CompilerParams(
            dimension_semantics=("parallel", "parallel")),   # megacore-shardable (v7x)
    )(lg, tg)

    # Independent per-tile partials -> reduce in the wrapper (also a tree reduction).
    return jnp.sum(nll_p), jnp.sum(cnt_p)


# ----------------------------------------------------------------------------
# Nearest-neighbor target resize (F.interpolate default mode='nearest').
# Integral scale factors (the usual pyramid) use a strided slice; otherwise a
# compile-time static-index gather.
# ----------------------------------------------------------------------------
def _nearest_resize_target(target, H, W):
    if target.ndim == 3:                      # (N, Ht, Wt) -> (N, 1, Ht, Wt)
        target = target[:, None]
    N, _, Ht, Wt = target.shape
    t2d = target.reshape(N, Ht, Wt)
    if Ht % H == 0 and Wt % W == 0:
        t = t2d[:, ::(Ht // H), ::(Wt // W)]                 # strided slice
    else:
        idx_h = np.minimum(np.floor(np.arange(H) * (Ht / H)), Ht - 1).astype(np.int32)
        idx_w = np.minimum(np.floor(np.arange(W) * (Wt / W)), Wt - 1).astype(np.int32)
        t = jnp.take(jnp.take(t2d, idx_h, axis=1), idx_w, axis=2)
    return t.astype(jnp.int32).reshape(N, H * W)


# ----------------------------------------------------------------------------
# Multi-scale cross-entropy loss (matches MscCrossEntropyLoss.forward)
# ----------------------------------------------------------------------------
def msc_cross_entropy_loss(inputs, target, ignore_index=IGNORE_INDEX):
    if not isinstance(inputs, (tuple, list)):
        inputs = (inputs,)
    total = jnp.float32(0.0)
    for item in inputs:
        N, C, H, W = item.shape
        tgt = _nearest_resize_target(target, H, W)           # (N, H*W) int32
        nll_sum, cnt = _ce_sums_one_scale(item, tgt, ignore_index)
        total = total + nll_sum / cnt                        # reduction='mean'
    return total / len(inputs)


# ----------------------------------------------------------------------------
# Pure-JAX reference (for correctness check)
# ----------------------------------------------------------------------------
def _reference_loss(inputs, target, ignore_index=IGNORE_INDEX):
    total = jnp.float32(0.0)
    for item in inputs:
        N, C, H, W = item.shape
        t = _nearest_resize_target(target, H, W)             # (N, HW)
        logp = jax.nn.log_softmax(item.reshape(N, C, H * W).astype(jnp.float32), axis=1)
        onehot = jax.nn.one_hot(jnp.clip(t, 0, C - 1), C, axis=1)
        nll = -jnp.sum(logp * onehot, axis=1)
        valid = t != ignore_index
        total = total + jnp.sum(jnp.where(valid, nll, 0.0)) / jnp.sum(valid)
    return total / len(inputs)


if __name__ == "__main__":
    key = jax.random.PRNGKey(0)
    k1, k2, k3 = jax.random.split(key, 3)

    # small multi-scale setup: two prediction scales + a full-res target map
    N, C, H, W = 2, 4, 16, 16
    logits_full = jax.random.normal(k1, (N, C, H, W), jnp.float32)
    logits_half = jax.random.normal(k2, (N, C, H // 2, W // 2), jnp.float32)
    target = jax.random.randint(k3, (N, 1, H, W), 0, C).astype(jnp.int32)
    target = target.at[:, :, 0, :2].set(IGNORE_INDEX)        # exercise ignore_index

    loss_fn = jax.jit(lambda a, b, t: msc_cross_entropy_loss((a, b), t))
    loss = loss_fn(logits_full, logits_half, target)
    jax.block_until_ready(loss)

    ref = _reference_loss((logits_full, logits_half), target)
    np.testing.assert_allclose(np.asarray(loss), np.asarray(ref),
                               rtol=1e-5, atol=1e-6)
    assert loss.shape == () and bool(jnp.isfinite(loss))
    print("KERNEL_OK")
</pallas_src>

<mosaic_0001>
module attributes {stable_mosaic.version = 11 : i64} {
  func.func @kernel(%arg0: i32, %arg1: i32, %arg2: memref<1x4x16x128xf32, #tpu.memory_space<vmem>>, %arg3: memref<1x16x128xi32, #tpu.memory_space<vmem>>, %arg4: memref<1x1x1x1xf32, #tpu.memory_space<vmem>>, %arg5: memref<1x1x1x1xf32, #tpu.memory_space<vmem>>) attributes {dimension_semantics = [#tpu.dimension_semantics<parallel>, #tpu.dimension_semantics<parallel>], iteration_bounds = array<i64: 2, 1>, scalar_prefetch = 0 : i64, scratch_operands = 0 : i64, tpu.core_type = #tpu.core_type<tc>, window_params = [{transform_indices = @transform_0, window_bounds = array<i64: 1, 4, 16, 128>}, {transform_indices = @transform_1, window_bounds = array<i64: 1, 16, 128>}, {transform_indices = @transform_2, window_bounds = array<i64: 1, 1, 1, 1>}, {transform_indices = @transform_3, window_bounds = array<i64: 1, 1, 1, 1>}]} {
    %c0 = arith.constant 0 : index
    %c0_0 = arith.constant 0 : index
    %c0_1 = arith.constant 0 : index
    %c0_2 = arith.constant 0 : index
    %0 = vector.load %arg2[%c0, %c0_0, %c0_1, %c0_2] : memref<1x4x16x128xf32, #tpu.memory_space<vmem>>, vector<1x4x16x128xf32>
    %1 = vector.shape_cast %0 : vector<1x4x16x128xf32> to vector<4x16x128xf32>
    %c0_3 = arith.constant 0 : index
    %c0_4 = arith.constant 0 : index
    %c0_5 = arith.constant 0 : index
    %2 = vector.load %arg3[%c0_3, %c0_4, %c0_5] : memref<1x16x128xi32, #tpu.memory_space<vmem>>, vector<1x16x128xi32>
    %3 = vector.shape_cast %2 : vector<1x16x128xi32> to vector<16x128xi32>
    %cst = arith.constant dense<0xFF800000> : vector<16x128xf32>
    %4 = vector.multi_reduction <maximumf>, %1, %cst [0] : vector<4x16x128xf32> to vector<16x128xf32>
    %5 = vector.shape_cast %4 : vector<16x128xf32> to vector<1x16x128xf32>
    %6 = vector.broadcast %5 : vector<1x16x128xf32> to vector<4x16x128xf32>
    %7 = arith.subf %1, %6 : vector<4x16x128xf32>
    %8 = math.exp %7 : vector<4x16x128xf32>
    %cst_6 = arith.constant dense<0.000000e+00> : vector<16x128xf32>
    %9 = vector.multi_reduction <add>, %8, %cst_6 [0] : vector<4x16x128xf32> to vector<16x128xf32>
    %10 = tpu.iota {dimensions = array<i32: 0>} : vector<4x16x128xi32>
    %11 = vector.shape_cast %3 : vector<16x128xi32> to vector<1x16x128xi32>
    %12 = vector.broadcast %11 : vector<1x16x128xi32> to vector<4x16x128xi32>
    %13 = arith.cmpi eq, %10, %12 : vector<4x16x128xi32>
    %cst_7 = arith.constant 0.000000e+00 : f32
    %14 = vector.broadcast %cst_7 : f32 to vector<4x16x128xf32>
    %15 = arith.select %13, %7, %14 : vector<4x16x128xi1>, vector<4x16x128xf32>
    %cst_8 = arith.constant dense<0.000000e+00> : vector<16x128xf32>
    %16 = vector.multi_reduction <add>, %15, %cst_8 [0] : vector<4x16x128xf32> to vector<16x128xf32>
    %c-100_i32 = arith.constant -100 : i32
    %17 = vector.broadcast %c-100_i32 : i32 to vector<16x128xi32>
    %18 = arith.cmpi ne, %3, %17 : vector<16x128xi32>
    %19 = math.log %9 : vector<16x128xf32>
    %20 = arith.subf %19, %16 : vector<16x128xf32>
    %cst_9 = arith.constant 0.000000e+00 : f32
    %21 = vector.broadcast %cst_9 : f32 to vector<16x128xf32>
    %22 = arith.select %18, %20, %21 : vector<16x128xi1>, vector<16x128xf32>
    %23 = vector.shape_cast %22 : vector<16x128xf32> to vector<1x16x128xf32>
    %cst_10 = arith.constant dense<0.000000e+00> : vector<1xf32>
    %24 = vector.multi_reduction <add>, %23, %cst_10 [1, 2] : vector<1x16x128xf32> to vector<1xf32>
    %25 = vector.shape_cast %24 : vector<1xf32> to vector<1x1x1xf32>
    %26 = vector.extract %25[0, 0, 0] : f32 from vector<1x1x1xf32>
    %27 = vector.broadcast %26 : f32 to vector<1x1x1x1xf32>
    %c0_11 = arith.constant 0 : index
    %c0_12 = arith.constant 0 : index
    %c0_13 = arith.constant 0 : index
    %c0_14 = arith.constant 0 : index
    %28 = vector.load %arg4[%c0_11, %c0_12, %c0_13, %c0_14] : memref<1x1x1x1xf32, #tpu.memory_space<vmem>>, vector<1x1x1x1xf32>
    tpu.vector_store %arg4[%c0_11, %c0_12, %c0_13, %c0_14], %27 {strides = array<i32>} : memref<1x1x1x1xf32, #tpu.memory_space<vmem>>, vector<1x1x1x1xf32>,
    %29 = arith.extui %18 : vector<16x128xi1> to vector<16x128xi32>
    %30 = arith.sitofp %29 : vector<16x128xi32> to vector<16x128xf32>
    %31 = vector.shape_cast %30 : vector<16x128xf32> to vector<1x16x128xf32>
    %cst_15 = arith.constant dense<0.000000e+00> : vector<1xf32>
    %32 = vector.multi_reduction <add>, %31, %cst_15 [1, 2] : vector<1x16x128xf32> to vector<1xf32>
    %33 = vector.shape_cast %32 : vector<1xf32> to vector<1x1x1xf32>
    %34 = vector.extract %33[0, 0, 0] : f32 from vector<1x1x1xf32>
    %35 = vector.broadcast %34 : f32 to vector<1x1x1x1xf32>
    %c0_16 = arith.constant 0 : index
    %c0_17 = arith.constant 0 : index
    %c0_18 = arith.constant 0 : index
    %c0_19 = arith.constant 0 : index
    %36 = vector.load %arg5[%c0_16, %c0_17, %c0_18, %c0_19] : memref<1x1x1x1xf32, #tpu.memory_space<vmem>>, vector<1x1x1x1xf32>
    tpu.vector_store %arg5[%c0_16, %c0_17, %c0_18, %c0_19], %35 {strides = array<i32>} : memref<1x1x1x1xf32, #tpu.memory_space<vmem>>, vector<1x1x1x1xf32>,
    return
  }
  func.func @transform_0(%arg0: i32, %arg1: i32) -> (i32, i32, i32, i32) {
    %c0_i32 = arith.constant 0 : i32
    %c0_i32_0 = arith.constant 0 : i32
    %c0_i32_1 = arith.constant 0 : i32
    return %arg0, %c0_i32, %arg1, %c0_i32_0 : i32, i32, i32, i32
  }
  func.func @transform_1(%arg0: i32, %arg1: i32) -> (i32, i32, i32) {
    %c0_i32 = arith.constant 0 : i32
    %c0_i32_0 = arith.constant 0 : i32
    return %arg0, %arg1, %c0_i32 : i32, i32, i32
  }
  func.func @transform_2(%arg0: i32, %arg1: i32) -> (i32, i32, i32, i32) {
    %c0_i32 = arith.constant 0 : i32
    %c0_i32_0 = arith.constant 0 : i32
    %c0_i32_1 = arith.constant 0 : i32
    return %arg0, %arg1, %c0_i32, %c0_i32_0 : i32, i32, i32, i32
  }
  func.func @transform_3(%arg0: i32, %arg1: i32) -> (i32, i32, i32, i32) {
    %c0_i32 = arith.constant 0 : i32
    %c0_i32_0 = arith.constant 0 : i32
    %c0_i32_1 = arith.constant 0 : i32
    return %arg0, %arg1, %c0_i32, %c0_i32_0 : i32, i32, i32, i32
  }
}

</mosaic_0001>

<llo_original>
// kernel: _lambda_.3
$region0: #{_lambda_.3}
  #allocation0 [shape = 'u32[]', space=smem, size = 0x4, offset = 0x4, fixed_abs, tag = 'smem constant byte address 0x4 - core index']
  #allocation1 [shape = 'u32[144,128]{1,0:T(1,128)}', space=vmem, size = 0x12000, scoped, tag = 'internal scratch']
  %s0 = inlined_call_operand.vmem [shape: f32[2,4,16,128], index: 0, kind: input, shape index: {}]
  %s1 = inlined_call_operand.vmem [shape: s32[2,16,128], index: 1, kind: input, shape index: {}]
  %s2 = inlined_call_operand.vmem [shape: f32[2,1,1,1], index: 2, kind: output, shape index: {0}]
  %s3 = inlined_call_operand.vmem [shape: f32[2,1,1,1], index: 3, kind: output, shape index: {1}]
  %4 = xla_tuple %s2, %s3
  %s5 = sld [smem:[#allocation0]]
  $region49: #{_lambda_.3} parent=0
    _
  %s7 = ssub.s32 1, %s5
  %s8 = scalar_select 0, %s7, %s5
  loop: start=0, step=1, limit=4
  $region2: #{_lambda_.3} parent=0 // loop_pre_header
    _
  $region3: #{_lambda_.3} parent=0 // loop_header
    %s10 = sphi 0, %s14
    %p11 = scmp.ge.s32.totalorder %s10, 4
    %s17 = sphi 0, %s29
    %s18 = sphi 0, %s25
    %s19 = sphi 0, %s17
    %s20 = sphi 0, %s18
    %s21 = sphi 0, %s19
    %s22 = sphi 0, %s20
    %s34 = sphi 0, %s36
    %s37 = sphi 0, %s34
    %s38 = sphi 0, %s37
    %s54 = sphi 0, %s38
    %s62 = sphi 0, %s64
    %s65 = sphi 0, %s62
    %s66 = sphi 0, %s65
    %s82 = sphi 0, %s66
    %s90 = sphi 0, %s92
    %s93 = sphi 0, %s90
    %s94 = sphi 0, %s93
    %s110 = sphi 0, %s94
    %s118 = sphi 0, %s120
    %s121 = sphi 0, %s118
    %s122 = sphi 0, %s121
    %s138 = sphi 0, %s122
  $region4: #{_lambda_.3} parent=0 // loop_header_branch
    %13 = sbr.rel (%p11) target = $region8
  $region5: #{_lambda_.3} parent=0 // loop_body
    %s15 = ssub.s32 %s10, 1
    %s16 = ssub.s32 %s10, 2
    %s23 = sadd.s32 1, %s18
    %p24 = scmp.ge.s32.totalorder %s23, 1
    %s25 = scalar_select %p24, 0, %s23
    %s26 = sadd.s32 1, %s17
    %s27 = scalar_select %p24, %s26, %s17
    %p28 = scmp.ge.s32.totalorder %s27, 2
    %s29 = scalar_select %p28, 0, %s27
    %s30 = ssub.s32 %s17, %s29
    %s31 = ssub.s32 %s18, %s25
    %s32 = sor.u32 %s30, %s31
    %p33 = scmp.eq.s32.totalorder %s32, 0
    %s35 = sadd.s32 %s34, 1
    %s36 = scalar_select %p33, %s34, %s35
    %p39 = pneg %p33
    %p40 = scmp.eq.s32.totalorder %s10, 1
    %p41 = por %p39, %p40
    %p42 = scmp.ne.s32.totalorder %s34, %s37
    %p43 = scmp.eq.s32.totalorder %s10, 0
    %p44 = por %p42, %p43
    %p45 = scmp.ne.s32.totalorder %s34, %s37
    %p46 = scmp.eq.s32.totalorder %s15, 1
    %p47 = por %p45, %p46
    %p48 = scmp.ne.s32.totalorder %s37, %s38
    %p49 = scmp.eq.s32.totalorder %s15, 0
    %p50 = por %p48, %p49
    %p51 = scmp.ne.s32.totalorder %s37, %s38
    %p52 = scmp.eq.s32.totalorder %s16, 1
    %p53 = por %p51, %p52
    %p55 = scmp.ne.s32.totalorder %s38, %s54
    %p56 = scmp.eq.s32.totalorder %s16, 0
    %p57 = por %p55, %p56
    %s58 = ssub.s32 %s17, %s29
    %s59 = ssub.s32 %s18, %s25
    %s60 = sor.u32 %s58, %s59
    %p61 = scmp.eq.s32.totalorder %s60, 0
    %s63 = sadd.s32 %s62, 1
    %s64 = scalar_select %p61, %s62, %s63
    %p67 = pneg %p61
    %p68 = scmp.eq.s32.totalorder %s10, 1
    %p69 = por %p67, %p68
    %p70 = scmp.ne.s32.totalorder %s62, %s65
    %p71 = scmp.eq.s32.totalorder %s10, 0
    %p72 = por %p70, %p71
    %p73 = scmp.ne.s32.totalorder %s62, %s65
    %p74 = scmp.eq.s32.totalorder %s15, 1
    %p75 = por %p73, %p74
    %p76 = scmp.ne.s32.totalorder %s65, %s66
    %p77 = scmp.eq.s32.totalorder %s15, 0
    %p78 = por %p76, %p77
    %p79 = scmp.ne.s32.totalorder %s65, %s66
    %p80 = scmp.eq.s32.totalorder %s16, 1
    %p81 = por %p79, %p80
    %p83 = scmp.ne.s32.totalorder %s66, %s82
    %p84 = scmp.eq.s32.totalorder %s16, 0
    %p85 = por %p83, %p84
    %s86 = ssub.s32 %s17, %s29
    %s87 = ssub.s32 %s18, %s25
    %s88 = sor.u32 %s86, %s87
    %p89 = scmp.eq.s32.totalorder %s88, 0
    %s91 = sadd.s32 %s90, 1
    %s92 = scalar_select %p89, %s90, %s91
    %p95 = pneg %p89
    %p96 = scmp.eq.s32.totalorder %s10, 1
    %p97 = por %p95, %p96
    %p98 = scmp.ne.s32.totalorder %s90, %s93
    %p99 = scmp.eq.s32.totalorder %s10, 0
    %p100 = por %p98, %p99
    %p101 = scmp.ne.s32.totalorder %s90, %s93
    %p102 = scmp.eq.s32.totalorder %s15, 1
    %p103 = por %p101, %p102
    %p104 = scmp.ne.s32.totalorder %s93, %s94
    %p105 = scmp.eq.s32.totalorder %s15, 0
    %p106 = por %p104, %p105
    %p107 = scmp.ne.s32.totalorder %s93, %s94
    %p108 = scmp.eq.s32.totalorder %s16, 1
    %p109 = por %p107, %p108
    %p111 = scmp.ne.s32.totalorder %s94, %s110
    %p112 = scmp.eq.s32.totalorder %s16, 0
    %p113 = por %p111, %p112
    %s114 = ssub.s32 %s17, %s29
    %s115 = ssub.s32 %s18, %s25
    %s116 = sor.u32 %s114, %s115
    %p117 = scmp.eq.s32.totalorder %s116, 0
    %s119 = sadd.s32 %s118, 1
    %s120 = scalar_select %p117, %s118, %s119
    %p123 = pneg %p117
    %p124 = scmp.eq.s32.totalorder %s10, 1
    %p125 = por %p123, %p124
    %p126 = scmp.ne.s32.totalorder %s118, %s121
    %p127 = scmp.eq.s32.totalorder %s10, 0
    %p128 = por %p126, %p127
    %p129 = scmp.ne.s32.totalorder %s118, %s121
    %p130 = scmp.eq.s32.totalorder %s15, 1
    %p131 = por %p129, %p130
    %p132 = scmp.ne.s32.totalorder %s121, %s122
    %p133 = scmp.eq.s32.totalorder %s15, 0
    %p134 = por %p132, %p133
    %p135 = scmp.ne.s32.totalorder %s121, %s122
    %p136 = scmp.eq.s32.totalorder %s16, 1
    %p137 = por %p135, %p136
    %p139 = scmp.ne.s32.totalorder %s122, %s138
    %p140 = scmp.eq.s32.totalorder %s16, 0
    %p141 = por %p139, %p140
    %p142 = scmp.le.s32.totalorder 1, %s10
    %p143 = scmp.lt.s32.totalorder %s10, 3
    %p144 = pnand %p142, %p143
    %p145 = pneg %p144
    // Predicated region
    $region9: #{_lambda_.3} parent=5 // pred_check
      _
    $region10: #{_lambda_.3} parent=5 // pred_check_branch
      %147 = sbr.rel (%p144) target = $region12
    $region11: #{_lambda_.3} parent=5 // pred_region
      %s148 = ssub.s32 %s10, 1
    $region12: #{_lambda_.3} parent=5 // pred_fallthru
      _
    %p149 = scmp.lt.s32.totalorder %s10, 2
    // Predicated region
    $region13: #{_lambda_.3} parent=5 // pred_check
      %p150 = pneg %p149
    $region14: #{_lambda_.3} parent=5 // pred_check_branch
      %152 = sbr.rel (%p150) target = $region16
    $region15: #{_lambda_.3} parent=5 // pred_region
      // Predicated region
      $region17: #{_lambda_.3} parent=15 // pred_check
        %p153 = pneg %p44
      $region18: #{_lambda_.3} parent=15 // pred_check_branch
        %155 = sbr.rel (%p153) target = $region20
      $region19: #{_lambda_.3} parent=15 // pred_region
        %s156 = smul.u32 2, %s18
        %p157 = scmp.lt.s32.totalorder %s17, 1
        %s158 = scalar_select %p157, %s17, 1
        %p159 = scmp.lt.s32.totalorder %s156, 1
        %s160 = scalar_select %p159, %s156, 1
        %s161 = smul.addr %s158, 8
        %s162 = sadd.s32 %s160, %s161
        %s163 = smul.addr %s162, 8
        %s164 = scalar_lea.vmem %s0, %s163
        %s165 = smul.u32 2, %s18
      $region20: #{_lambda_.3} parent=15 // pred_fallthru
        _
      // Predicated region
      $region21: #{_lambda_.3} parent=15 // pred_check
        %p166 = pneg %p72
      $region22: #{_lambda_.3} parent=15 // pred_check_branch
        %168 = sbr.rel (%p166) target = $region24
      $region23: #{_lambda_.3} parent=15 // pred_region
        %s169 = smul.u32 2, %s18
        %p170 = scmp.lt.s32.totalorder %s17, 1
        %s171 = scalar_select %p170, %s17, 1
        %p172 = scmp.lt.s32.totalorder %s169, 1
        %s173 = scalar_select %p172, %s169, 1
        %s174 = smul.addr %s171, 2
        %s175 = sadd.s32 %s173, %s174
        %s176 = smul.addr %s175, 8
        %s177 = scalar_lea.vmem %s1, %s176
        %s178 = smul.u32 2, %s18
      $region24: #{_lambda_.3} parent=15 // pred_fallthru
        _
    $region16: #{_lambda_.3} parent=5 // pred_fallthru
      _
    %p179 = scmp.le.s32.totalorder 1, %s10
    %p180 = scmp.lt.s32.totalorder %s10, 3
    %p181 = pnand %p179, %p180
    %p182 = pneg %p181
    // Predicated region
    $region25: #{_lambda_.3} parent=5 // pred_check
      _
    $region26: #{_lambda_.3} parent=5 // pred_check_branch
      %184 = sbr.rel (%p181) target = $region28
    $region27: #{_lambda_.3} parent=5 // pred_region
      %s185 = ssub.s32 %s10, 1
      %s186 = smul.u32 2, %s20
      %p187 = scmp.lt.s32.totalorder %s19, 1
      %s188 = scalar_select %p187, %s19, 1
      %p189 = scmp.lt.s32.totalorder %s186, 1
      %s190 = scalar_select %p189, %s186, 1
      %s191 = smul.addr %s188, 8
      %s192 = sadd.s32 %s190, %s191
      %s193 = smul.addr %s192, 8
      %s194 = scalar_lea.vmem %s0, %s193
      %p195 = pneg %p50
      %p196 = pneg %p47
      %s197 = smul.u32 2, %s20
      %p198 = scmp.lt.s32.totalorder %s19, 1
      %s199 = scalar_select %p198, %s19, 1
      %p200 = scmp.lt.s32.totalorder %s197, 1
      %s201 = scalar_select %p200, %s197, 1
      %s202 = smul.addr %s199, 2
      %s203 = sadd.s32 %s201, %s202
      %s204 = smul.addr %s203, 8
      %s205 = scalar_lea.vmem %s1, %s204
      %p206 = pneg %p78
      %p207 = pneg %p75
      %p208 = pneg %p106
      %p209 = pneg %p103
      %p210 = scmp.lt.s32.totalorder %s19, 1
      %s211 = scalar_select %p210, %s19, 1
      %p212 = scmp.lt.s32.totalorder %s20, 0
      %s213 = scalar_select %p212, %s20, 0
      %s214 = sadd.s32 %s213, %s211
      %s215 = scalar_lea.vmem %s2, %s214
      %p216 = pneg %p134
      %p217 = pneg %p131
      %p218 = scmp.lt.s32.totalorder %s19, 1
      %s219 = scalar_select %p218, %s19, 1
      %p220 = scmp.lt.s32.totalorder %s20, 0
      %s221 = scalar_select %p220, %s20, 0
      %s222 = sadd.s32 %s221, %s219
      %s223 = scalar_lea.vmem %s3, %s222
      %s224 = smul.u32 2, %s20
      %p225 = scmp.lt.s32.totalorder %s19, 1
      %s226 = scalar_select %p225, %s19, 1
      %p227 = scmp.lt.s32.totalorder %s224, 1
      %s228 = scalar_select %p227, %s224, 1
      %s229 = smul.addr %s226, 8
      %s230 = sadd.s32 %s228, %s229
      %s231 = smul.addr %s230, 8
      %s232 = scalar_lea.vmem %s0, %s231
      %s233 = smul.u32 2, %s20
      %s234 = smul.u32 2, %s20
      %p235 = scmp.lt.s32.totalorder %s19, 1
      %s236 = scalar_select %p235, %s19, 1
      %p237 = scmp.lt.s32.totalorder %s234, 1
      %s238 = scalar_select %p237, %s234, 1
      %s239 = smul.addr %s236, 2
      %s240 = sadd.s32 %s238, %s239
      %s241 = smul.addr %s240, 8
      %s242 = scalar_lea.vmem %s1, %s241
      %s243 = smul.u32 2, %s20
      %p244 = scmp.lt.s32.totalorder %s19, 1
      %s245 = scalar_select %p244, %s19, 1
      %p246 = scmp.lt.s32.totalorder %s20, 0
      %s247 = scalar_select %p246, %s20, 0
      %s248 = sadd.s32 %s247, %s245
      %s249 = scalar_lea.vmem %s2, %s248
      %p250 = scmp.lt.s32.totalorder %s19, 1
      %s251 = scalar_select %p250, %s19, 1
      %p252 = scmp.lt.s32.totalorder %s20, 0
      %s253 = scalar_select %p252, %s20, 0
      %s254 = sadd.s32 %s253, %s251
      %s255 = scalar_lea.vmem %s3, %s254
      %v256 = vld [vmem:[%s232] sm:$0xff]
      %v257 = vld [vmem:[%s232 + $0x8] sm:$0xff]
      %v258 = vld [vmem:[%s232 + $0x10] sm:$0xff]
      %v259 = vld [vmem:[%s232 + $0x18] sm:$0xff]
      %v260 = vld [vmem:[%s232 + $0x20] sm:$0xff]
      %v261 = vld [vmem:[%s232 + $0x28] sm:$0xff]
      %v262 = vld [vmem:[%s232 + $0x30] sm:$0xff]
      %v263 = vld [vmem:[%s232 + $0x38] sm:$0xff]
      %v264 = vld [vmem:[%s242] sm:$0xff]
      %v265 = vld [vmem:[%s242 + $0x8] sm:$0xff]
      %v266 = vmax.f32 %v256, %v260
      %v267 = vmax.f32 %v258, %v262
      %v268 = vmax.f32 %v266, %v267
      %v269 = vmax.f32 %v257, %v261
      %v270 = vmax.f32 %v259, %v263
      %v271 = vmax.f32 %v269, %v270
      %v272 = vsub.f32 %v256, %v268
      %v273 = vsub.f32 %v257, %v271
      %v274 = vsub.f32 %v258, %v268
      %v275 = vsub.f32 %v259, %v271
      %v276 = vsub.f32 %v260, %v268
      %v277 = vsub.f32 %v261, %v271
      %v278 = vsub.f32 %v262, %v268
      %v279 = vsub.f32 %v263, %v271
      %v280 = vmul.f32 %v272, 1.442695
      %v281 = vpow.pop %v280
      %v282 = vmul.f32 %v273, 1.442695
      %v283 = vpow.pop %v282
      %v284 = vmul.f32 %v274, 1.442695
      %v285 = vpow.pop %v284
      %v286 = vmul.f32 %v275, 1.442695
      %v287 = vpow.pop %v286
      %v288 = vmul.f32 %v276, 1.442695
      %v289 = vpow.pop %v288
      %v290 = vmul.f32 %v277, 1.442695
      %v291 = vpow.pop %v290
      %v292 = vmul.f32 %v278, 1.442695
      %v293 = vpow.pop %v292
      %v294 = vmul.f32 %v279, 1.442695
      %v295 = vpow.pop %v294
      %v296 = vadd.f32 %v281, %v285
      %v297 = vadd.f32 %v296, %v289
      %v298 = vadd.f32 %v297, %v293
      %v299 = vadd.f32 %v283, %v287
      %v300 = vadd.f32 %v299, %v291
      %v301 = vadd.f32 %v300, %v295
      %vm302 = vcmp.eq.s32.totalorder %v264, 0
      %vm303 = vcmp.eq.s32.totalorder %v265, 0
      %vm304 = vcmp.eq.s32.totalorder %v264, 1
      %vm305 = vcmp.eq.s32.totalorder %v265, 1
      %vm306 = vcmp.eq.s32.totalorder %v264, 2
      %vm307 = vcmp.eq.s32.totalorder %v265, 2
      %vm308 = vcmp.eq.s32.totalorder %v264, 3
      %vm309 = vcmp.eq.s32.totalorder %v265, 3
      %v310 = vsel %vm302, %v272, 0.0
      %v311 = vsel %vm303, %v273, 0.0
      %v312 = vsel %vm304, %v274, 0.0
      %v313 = vsel %vm305, %v275, 0.0
      %v314 = vsel %vm306, %v276, 0.0
      %v315 = vsel %vm307, %v277, 0.0
      %v316 = vsel %vm308, %v278, 0.0
      %v317 = vsel %vm309, %v279, 0.0
      %v318 = vadd.f32 %v310, %v312
      %v319 = vadd.f32 %v318, %v314
      %v320 = vadd.f32 %v319, %v316
      %v321 = vadd.f32 %v311, %v313
      %v322 = vadd.f32 %v321, %v315
      %v323 = vadd.f32 %v322, %v317
      %vm324 = vcmp.ne.s32.totalorder %v264, 4294967196
      %vm325 = vcmp.ne.s32.totalorder %v265, 4294967196
      %v326 = vlog2.pop %v298
      %v327 = vmul.f32 %v326, 0.6931472
      %v328 = vlog2.pop %v301
      %v329 = vmul.f32 %v328, 0.6931472
      %v330 = vsub.f32 %v327, %v320
      %v331 = vsub.f32 %v329, %v323
      %v332 = vsel %vm324, %v330, 0.0
      %v333 = vsel %vm325, %v331, 0.0
      %v334 = vadd.f32 %v332, %v333
      %335 = vadd.xlane.f32.xlu0 %v334
      %v336 = vpop.xlane.xlu0 %335
      %v337 = vrot.slane %v336, 4
      %v338 = vadd.f32 %v336, %v337
      %v339 = vrot.slane %v338, 2
      %v340 = vadd.f32 %v338, %v339
      %v341 = vrot.slane %v340, 1
      %v342 = vadd.f32 %v340, %v341
      %s343 = vtos %v342
      %v344 = vstv %s343
      %vm345 = vcmask 0
      %346 = vst.msk [vmem:[%s249] sm:$0x1] %vm345, %v344
      %v347 = vsel %vm324, 1, 0
      %v348 = vsel %vm325, 1, 0
      %v349 = vcvt.s32.f32 %v347
      %v350 = vcvt.s32.f32 %v348
      %v351 = vadd.f32 %v349, %v350
      %352 = vadd.xlane.f32.xlu0 %v351
      %v353 = vpop.xlane.xlu0 %352
      %v354 = vrot.slane %v353, 4
      %v355 = vadd.f32 %v353, %v354
      %v356 = vrot.slane %v355, 2
      %v357 = vadd.f32 %v355, %v356
      %v358 = vrot.slane %v357, 1
      %v359 = vadd.f32 %v357, %v358
      %s360 = vtos %v359
      %v361 = vstv %s360
      %362 = vst.msk [vmem:[%s255] sm:$0x1] %vm345, %v361
      %p363 = scmp.lt.s32.totalorder %s19, 1
      %s364 = scalar_select %p363, %s19, 1
      %p365 = scmp.lt.s32.totalorder %s20, 0
      %s366 = scalar_select %p365, %s20, 0
      %s367 = sadd.s32 %s366, %s364
      %s368 = scalar_lea.vmem %s2, %s367
      %p369 = scmp.lt.s32.totalorder %s19, 1
      %s370 = scalar_select %p369, %s19, 1
      %p371 = scmp.lt.s32.totalorder %s20, 0
      %s372 = scalar_select %p371, %s20, 0
      %s373 = sadd.s32 %s372, %s370
      %s374 = scalar_lea.vmem %s3, %s373
      // Predicated region
      $region29: #{_lambda_.3} parent=27 // pred_check
        %p375 = pneg %p103
      $region30: #{_lambda_.3} parent=27 // pred_check_branch
        %377 = sbr.rel (%p375) target = $region32
      $region31: #{_lambda_.3} parent=27 // pred_region
        _
      $region32: #{_lambda_.3} parent=27 // pred_fallthru
        _
      // Predicated region
      $region33: #{_lambda_.3} parent=27 // pred_check
        %p378 = pneg %p131
      $region34: #{_lambda_.3} parent=27 // pred_check_branch
        %380 = sbr.rel (%p378) target = $region36
      $region35: #{_lambda_.3} parent=27 // pred_region
        _
      $region36: #{_lambda_.3} parent=27 // pred_fallthru
        _
    $region28: #{_lambda_.3} parent=5 // pred_fallthru
      _
    %p381 = scmp.le.s32.totalorder 2, %s10
    // Predicated region
    $region37: #{_lambda_.3} parent=5 // pred_check
      %p382 = pneg %p381
    $region38: #{_lambda_.3} parent=5 // pred_check_branch
      %384 = sbr.rel (%p382) target = $region40
    $region39: #{_lambda_.3} parent=5 // pred_region
      %s385 = ssub.s32 %s10, 2
      // Predicated region
      $region41: #{_lambda_.3} parent=39 // pred_check
        %p386 = pneg %p109
      $region42: #{_lambda_.3} parent=39 // pred_check_branch
        %388 = sbr.rel (%p386) target = $region44
      $region43: #{_lambda_.3} parent=39 // pred_region
        %p389 = scmp.lt.s32.totalorder %s21, 1
        %s390 = scalar_select %p389, %s21, 1
        %p391 = scmp.lt.s32.totalorder %s22, 0
        %s392 = scalar_select %p391, %s22, 0
        %s393 = sadd.s32 %s392, %s390
        %s394 = scalar_lea.vmem %s2, %s393
      $region44: #{_lambda_.3} parent=39 // pred_fallthru
        _
      // Predicated region
      $region45: #{_lambda_.3} parent=39 // pred_check
        %p395 = pneg %p137
      $region46: #{_lambda_.3} parent=39 // pred_check_branch
        %397 = sbr.rel (%p395) target = $region48
      $region47: #{_lambda_.3} parent=39 // pred_region
        %p398 = scmp.lt.s32.totalorder %s21, 1
        %s399 = scalar_select %p398, %s21, 1
        %p400 = scmp.lt.s32.totalorder %s22, 0
        %s401 = scalar_select %p400, %s22, 0
        %s402 = sadd.s32 %s401, %s399
        %s403 = scalar_lea.vmem %s3, %s402
      $region48: #{_lambda_.3} parent=39 // pred_fallthru
        _
    $region40: #{_lambda_.3} parent=5 // pred_fallthru
      _
  $region6: #{_lambda_.3} parent=0 // loop_footer
    %s14 = sadd.s32 1, %s10
  $region7: #{_lambda_.3} parent=0 // loop_footer_branch
    %9 = sbr.rel target = $region3
  $region8: #{_lambda_.3} parent=0 // loop_exit
    _

</llo_original>
